<compile_context>
chip_gen: v5e
topology: v5e:2x2
jax: 0.10.0
libtpu: 0.0.40
codegen_flags: <defaults>
</compile_context>

<pallas_src>
import functools
import math

import jax
import jax.numpy as jnp
from jax import lax
from jax.experimental import pallas as pl
from jax.experimental.pallas import tpu as pltpu


def _vdiff_kernel(alpha_ref, beta_ref, sig_ref,       # SMEM (B,) scalar-prefetched
                  x_ref, n_ref,                       # VMEM (bb, C, T) bf16/f32
                  w_ref, b_ref, sw_ref,               # VMEM (C,C), (C,1), (C,1)
                  part_ref,                           # VMEM (1, C, 128) partials
                  *, bb, t, c, unroll):
    base = pl.program_id(0) * bb

    def body(j, acc):
        a = alpha_ref[base + j]                       # scalars from SMEM
        be = beta_ref[base + j]
        sg = sig_ref[base + j]
        xj = x_ref[j].astype(jnp.float32)             # (C, T) f32 compute
        nj = n_ref[j].astype(jnp.float32)             # (C, T)
        noisy = xj * a + nj * be                      # (C, T)
        tgt = nj * a - xj * be                        # (C, T)
        # Synthetic `net`: 1x1 conv over channels (tiny MXU dot) + FiLM.
        h = jnp.dot(w_ref[...], noisy, preferred_element_type=jnp.float32)
        film = b_ref[...] + sw_ref[...] * sg          # (C, 1), broadcast once below
        err = h - tgt + film                          # (C, T)
        e2 = err * err
        # Lane-fold across T in static 128-wide chunks: pure VPU adds, no
        # cross-lane (XLU) reduce inside the kernel.
        for k in range(t // 128):
            acc = acc + e2[:, k * 128:(k + 1) * 128]
        return acc

    acc0 = jnp.zeros((c, 128), jnp.float32)
    part_ref[0] = lax.fori_loop(0, bb, body, acc0, unroll=unroll)


def _vmem_limits():
    """Per-chip VMEM limit + tile budget (limit minus headroom)."""
    try:
        cap = pltpu.get_tpu_info().vmem_capacity_bytes
    except Exception:
        cap = 64 << 20                                 # conservative fallback (v7x-sized)
    # 128 MiB (v5e/v6e) -> 96 MiB limit; 64 MiB (v7x) -> 48 MiB limit.
    limit = min((cap * 3) // 4, 96 << 20)
    # Headroom for w/bias/sig_w/output double-buffering + in-kernel f32 temps.
    budget = int(limit * 0.8)
    return int(limit), budget


def _pick_bb(B, C, T, itemsize, budget_bytes, max_unroll=32):
    """Largest batch-block whose pipelined footprint fits the VMEM budget.

    Footprint/step ~= 2 inputs x 2 pipeline buffers x (bb*C*T*itemsize).
    Prefer >= 4 grid blocks (>= 2 per v7x TensorCore) so the parallel axis
    splits across cores and each core still double-buffers its DMAs.
    """
    fitting = []
    for bb in range(1, min(B, max_unroll) + 1):
        if B % bb:
            continue
        if 2 * 2 * bb * C * T * itemsize <= budget_bytes:
            fitting.append(bb)
    if not fitting:
        return 1
    for min_blocks in (4, 2, 1):
        cand = [bb for bb in fitting if B // bb >= min_blocks]
        if cand:
            return max(cand)
    return max(fitting)


def v_diffusion_loss(x, noise, sigmas, w, bias, sig_w):
    """x, noise: (B, C, T) (bf16 preferred); sigmas: (B,); w: (C, C); bias, sig_w: (C, 1)."""
    B, C, T = x.shape
    assert T % 128 == 0, "T must be a multiple of 128 (lane dim)"
    assert C % 8 == 0, "C must be a multiple of 8 (sublane dim)"

    vmem_limit, budget = _vmem_limits()
    bb = _pick_bb(B, C, T, jnp.dtype(x.dtype).itemsize, budget)
    nblk = B // bb

    # Per-batch trig precomputed here (2 scalar transcendentals per batch,
    # essentially free) -> no EUP work inside the kernel (matters on v5e).
    sig32 = sigmas.astype(jnp.float32)
    angle = sig32 * (math.pi / 2.0)
    alpha = jnp.cos(angle)
    beta = jnp.sin(angle)

    kernel = functools.partial(_vdiff_kernel, bb=bb, t=T, c=C, unroll=(bb <= 8))

    grid_spec = pltpu.PrefetchScalarGridSpec(
        num_scalar_prefetch=3,                         # alpha, beta, sigmas -> SMEM
        grid=(nblk,),
        in_specs=[
            pl.BlockSpec((bb, C, T), lambda i, a, b2, s: (i, 0, 0)),   # x
            pl.BlockSpec((bb, C, T), lambda i, a, b2, s: (i, 0, 0)),   # noise
            pl.BlockSpec((C, C), lambda i, a, b2, s: (0, 0)),          # conv1x1 weight
            pl.BlockSpec((C, 1), lambda i, a, b2, s: (0, 0)),          # bias
            pl.BlockSpec((C, 1), lambda i, a, b2, s: (0, 0)),          # sigma FiLM weight
        ],
        out_specs=pl.BlockSpec((1, C, 128), lambda i, a, b2, s: (i, 0, 0)),
    )

    partials = pl.pallas_call(
        kernel,
        grid_spec=grid_spec,
        out_shape=jax.ShapeDtypeStruct((nblk, C, 128), jnp.float32),
        compiler_params=pltpu.CompilerParams(
            dimension_semantics=("parallel",),         # per-block partials: race-free
            vmem_limit_bytes=vmem_limit,
        ),
    )(alpha, beta, sig32, x, noise, w, bias, sig_w)

    # Tiny final reduce + mean normalization outside the kernel.
    return jnp.sum(partials) * (1.0 / float(B * C * T))


def _reference_loss(x, noise, sigmas, w, bias, sig_w):
    x = x.astype(jnp.float32)
    noise = noise.astype(jnp.float32)
    angle = sigmas.astype(jnp.float32) * (jnp.pi / 2.0)
    alpha = jnp.cos(angle)[:, None, None]
    beta = jnp.sin(angle)[:, None, None]
    x_noisy = x * alpha + noise * beta
    x_target = noise * alpha - x * beta
    x_den = (jnp.einsum("oc,bct->bot", w, x_noisy)
             + bias[None, :, :]
             + sig_w[None, :, :] * sigmas[:, None, None])
    return jnp.mean((x_den - x_target) ** 2)


if __name__ == "__main__":
    B, C, T = 8, 8, 256

    key = jax.random.PRNGKey(0)
    k_x, k_n, k_s, k_w, k_b, k_sw = jax.random.split(key, 6)

    # bf16 inputs: halves HBM traffic for the (memory-bound) kernel.
    x = jax.random.normal(k_x, (B, C, T), dtype=jnp.float32).astype(jnp.bfloat16)
    noise = jax.random.normal(k_n, (B, C, T), dtype=jnp.float32).astype(jnp.bfloat16)
    # sigma_distribution: uniform(0, 1) per batch element (deterministic key).
    sigmas = jax.random.uniform(k_s, (B,), dtype=jnp.float32)

    # Deterministic synthetic net parameters (1x1 conv + bias + sigma FiLM).
    w = jax.random.normal(k_w, (C, C), dtype=jnp.float32) * (1.0 / math.sqrt(C))
    bias = jax.random.normal(k_b, (C, 1), dtype=jnp.float32) * 0.1
    sig_w = jax.random.normal(k_sw, (C, 1), dtype=jnp.float32) * 0.1

    loss = jax.block_until_ready(v_diffusion_loss(x, noise, sigmas, w, bias, sig_w))
    ref = jax.block_until_ready(_reference_loss(x, noise, sigmas, w, bias, sig_w))

    assert jnp.isfinite(loss), "kernel produced non-finite loss"
    assert abs(float(loss) - float(ref)) <= 2e-3 * max(1.0, abs(float(ref))), (
        float(loss), float(ref))
    print("KERNEL_OK")
</pallas_src>

<mosaic_0001>
module attributes {stable_mosaic.version = 11 : i64} {
  func.func @_vdiff_kernel(%arg0: i32, %arg1: memref<8xf32, #tpu.memory_space<smem>>, %arg2: memref<8xf32, #tpu.memory_space<smem>>, %arg3: memref<8xf32, #tpu.memory_space<smem>>, %arg4: memref<2x8x256xbf16, #tpu.memory_space<vmem>>, %arg5: memref<2x8x256xbf16, #tpu.memory_space<vmem>>, %arg6: memref<8x8xf32, #tpu.memory_space<vmem>>, %arg7: memref<8x1xf32, #tpu.memory_space<vmem>>, %arg8: memref<8x1xf32, #tpu.memory_space<vmem>>, %arg9: memref<1x8x128xf32, #tpu.memory_space<vmem>>) attributes {dimension_semantics = [#tpu.dimension_semantics<parallel>], iteration_bounds = array<i64: 4>, scalar_prefetch = 3 : i64, scratch_operands = 0 : i64, tpu.core_type = #tpu.core_type<tc>, window_params = [{transform_indices = @transform_0, window_bounds = array<i64: 2, 8, 256>}, {transform_indices = @transform_1, window_bounds = array<i64: 2, 8, 256>}, {pipeline_mode = #tpu.pipeline_mode<synchronous>, transform_indices = @transform_2, window_bounds = array<i64: 8, 8>}, {pipeline_mode = #tpu.pipeline_mode<synchronous>, transform_indices = @transform_3, window_bounds = array<i64: 8, 1>}, {pipeline_mode = #tpu.pipeline_mode<synchronous>, transform_indices = @transform_4, window_bounds = array<i64: 8, 1>}, {transform_indices = @transform_5, window_bounds = array<i64: 1, 8, 128>}]} {
    %c2_i32 = arith.constant 2 : i32
    %0 = arith.muli %arg0, %c2_i32 : i32
    %cst = arith.constant 0.000000e+00 : f32
    %1 = vector.broadcast %cst : f32 to vector<8x128xf32>
    %c0_i32 = arith.constant 0 : i32
    %2 = arith.addi %0, %c0_i32 : i32
    %3 = arith.index_cast %2 : i32 to index
    %4 = memref.load %arg1[%3] : memref<8xf32, #tpu.memory_space<smem>>
    %5 = arith.addi %0, %c0_i32 : i32
    %6 = arith.index_cast %5 : i32 to index
    %7 = memref.load %arg2[%6] : memref<8xf32, #tpu.memory_space<smem>>
    %8 = arith.addi %0, %c0_i32 : i32
    %9 = arith.index_cast %8 : i32 to index
    %10 = memref.load %arg3[%9] : memref<8xf32, #tpu.memory_space<smem>>
    %11 = arith.index_cast %c0_i32 : i32 to index
    %c0 = arith.constant 0 : index
    %c0_0 = arith.constant 0 : index
    %12 = vector.load %arg4[%11, %c0, %c0_0] : memref<2x8x256xbf16, #tpu.memory_space<vmem>>, vector<1x8x256xbf16>
    %13 = vector.shape_cast %12 : vector<1x8x256xbf16> to vector<8x256xbf16>
    %14 = arith.extf %13 : vector<8x256xbf16> to vector<8x256xf32>
    %15 = arith.index_cast %c0_i32 : i32 to index
    %c0_1 = arith.constant 0 : index
    %c0_2 = arith.constant 0 : index
    %16 = vector.load %arg5[%15, %c0_1, %c0_2] : memref<2x8x256xbf16, #tpu.memory_space<vmem>>, vector<1x8x256xbf16>
    %17 = vector.shape_cast %16 : vector<1x8x256xbf16> to vector<8x256xbf16>
    %18 = arith.extf %17 : vector<8x256xbf16> to vector<8x256xf32>
    %19 = vector.broadcast %4 : f32 to vector<8x256xf32>
    %20 = arith.mulf %14, %19 : vector<8x256xf32>
    %21 = vector.broadcast %7 : f32 to vector<8x256xf32>
    %22 = arith.mulf %18, %21 : vector<8x256xf32>
    %23 = arith.addf %20, %22 : vector<8x256xf32>
    %24 = vector.broadcast %4 : f32 to vector<8x256xf32>
    %25 = arith.mulf %18, %24 : vector<8x256xf32>
    %26 = vector.broadcast %7 : f32 to vector<8x256xf32>
    %27 = arith.mulf %14, %26 : vector<8x256xf32>
    %28 = arith.subf %25, %27 : vector<8x256xf32>
    %c0_3 = arith.constant 0 : index
    %c0_4 = arith.constant 0 : index
    %29 = vector.load %arg6[%c0_3, %c0_4] : memref<8x8xf32, #tpu.memory_space<vmem>>, vector<8x8xf32>
    %cst_5 = arith.constant dense<0.000000e+00> : vector<8x256xf32>
    %30 = tpu.matmul %29, %23, %cst_5 {dimension_numbers = #tpu.dot_dimension_numbers<[1], [0], [0], [1], [0, 0, 1, 1], [], []>} : vector<8x8xf32>, vector<8x256xf32>, vector<8x256xf32> -> vector<8x256xf32>
    %c0_6 = arith.constant 0 : index
    %c0_7 = arith.constant 0 : index
    %31 = vector.load %arg7[%c0_6, %c0_7] : memref<8x1xf32, #tpu.memory_space<vmem>>, vector<8x1xf32>
    %c0_8 = arith.constant 0 : index
    %c0_9 = arith.constant 0 : index
    %32 = vector.load %arg8[%c0_8, %c0_9] : memref<8x1xf32, #tpu.memory_space<vmem>>, vector<8x1xf32>
    %33 = vector.broadcast %10 : f32 to vector<8x1xf32>
    %34 = arith.mulf %32, %33 : vector<8x1xf32>
    %35 = arith.addf %31, %34 : vector<8x1xf32>
    %36 = arith.subf %30, %28 : vector<8x256xf32>
    %37 = vector.broadcast %35 : vector<8x1xf32> to vector<8x256xf32>
    %38 = arith.addf %36, %37 : vector<8x256xf32>
    %39 = arith.mulf %38, %38 : vector<8x256xf32>
    %40 = vector.extract_strided_slice %39 {offsets = [0, 0], sizes = [8, 128], strides = [1, 1]} : vector<8x256xf32> to vector<8x128xf32>
    %41 = arith.addf %1, %40 : vector<8x128xf32>
    %42 = vector.extract_strided_slice %39 {offsets = [0, 128], sizes = [8, 128], strides = [1, 1]} : vector<8x256xf32> to vector<8x128xf32>
    %43 = arith.addf %41, %42 : vector<8x128xf32>
    %c1_i32 = arith.constant 1 : i32
    %44 = arith.addi %0, %c1_i32 : i32
    %45 = arith.index_cast %44 : i32 to index
    %46 = memref.load %arg1[%45] : memref<8xf32, #tpu.memory_space<smem>>
    %47 = arith.addi %0, %c1_i32 : i32
    %48 = arith.index_cast %47 : i32 to index
    %49 = memref.load %arg2[%48] : memref<8xf32, #tpu.memory_space<smem>>
    %50 = arith.addi %0, %c1_i32 : i32
    %51 = arith.index_cast %50 : i32 to index
    %52 = memref.load %arg3[%51] : memref<8xf32, #tpu.memory_space<smem>>
    %53 = arith.index_cast %c1_i32 : i32 to index
    %c0_10 = arith.constant 0 : index
    %c0_11 = arith.constant 0 : index
    %54 = vector.load %arg4[%53, %c0_10, %c0_11] : memref<2x8x256xbf16, #tpu.memory_space<vmem>>, vector<1x8x256xbf16>
    %55 = vector.shape_cast %54 : vector<1x8x256xbf16> to vector<8x256xbf16>
    %56 = arith.extf %55 : vector<8x256xbf16> to vector<8x256xf32>
    %57 = arith.index_cast %c1_i32 : i32 to index
    %c0_12 = arith.constant 0 : index
    %c0_13 = arith.constant 0 : index
    %58 = vector.load %arg5[%57, %c0_12, %c0_13] : memref<2x8x256xbf16, #tpu.memory_space<vmem>>, vector<1x8x256xbf16>
    %59 = vector.shape_cast %58 : vector<1x8x256xbf16> to vector<8x256xbf16>
    %60 = arith.extf %59 : vector<8x256xbf16> to vector<8x256xf32>
    %61 = vector.broadcast %46 : f32 to vector<8x256xf32>
    %62 = arith.mulf %56, %61 : vector<8x256xf32>
    %63 = vector.broadcast %49 : f32 to vector<8x256xf32>
    %64 = arith.mulf %60, %63 : vector<8x256xf32>
    %65 = arith.addf %62, %64 : vector<8x256xf32>
    %66 = vector.broadcast %46 : f32 to vector<8x256xf32>
    %67 = arith.mulf %60, %66 : vector<8x256xf32>
    %68 = vector.broadcast %49 : f32 to vector<8x256xf32>
    %69 = arith.mulf %56, %68 : vector<8x256xf32>
    %70 = arith.subf %67, %69 : vector<8x256xf32>
    %c0_14 = arith.constant 0 : index
    %c0_15 = arith.constant 0 : index
    %71 = vector.load %arg6[%c0_14, %c0_15] : memref<8x8xf32, #tpu.memory_space<vmem>>, vector<8x8xf32>
    %cst_16 = arith.constant dense<0.000000e+00> : vector<8x256xf32>
    %72 = tpu.matmul %71, %65, %cst_16 {dimension_numbers = #tpu.dot_dimension_numbers<[1], [0], [0], [1], [0, 0, 1, 1], [], []>} : vector<8x8xf32>, vector<8x256xf32>, vector<8x256xf32> -> vector<8x256xf32>
    %c0_17 = arith.constant 0 : index
    %c0_18 = arith.constant 0 : index
    %73 = vector.load %arg7[%c0_17, %c0_18] : memref<8x1xf32, #tpu.memory_space<vmem>>, vector<8x1xf32>
    %c0_19 = arith.constant 0 : index
    %c0_20 = arith.constant 0 : index
    %74 = vector.load %arg8[%c0_19, %c0_20] : memref<8x1xf32, #tpu.memory_space<vmem>>, vector<8x1xf32>
    %75 = vector.broadcast %52 : f32 to vector<8x1xf32>
    %76 = arith.mulf %74, %75 : vector<8x1xf32>
    %77 = arith.addf %73, %76 : vector<8x1xf32>
    %78 = arith.subf %72, %70 : vector<8x256xf32>
    %79 = vector.broadcast %77 : vector<8x1xf32> to vector<8x256xf32>
    %80 = arith.addf %78, %79 : vector<8x256xf32>
    %81 = arith.mulf %80, %80 : vector<8x256xf32>
    %82 = vector.extract_strided_slice %81 {offsets = [0, 0], sizes = [8, 128], strides = [1, 1]} : vector<8x256xf32> to vector<8x128xf32>
    %83 = arith.addf %43, %82 : vector<8x128xf32>
    %84 = vector.extract_strided_slice %81 {offsets = [0, 128], sizes = [8, 128], strides = [1, 1]} : vector<8x256xf32> to vector<8x128xf32>
    %85 = arith.addf %83, %84 : vector<8x128xf32>
    %c2_i32_21 = arith.constant 2 : i32
    %c0_22 = arith.constant 0 : index
    %c0_23 = arith.constant 0 : index
    %c0_24 = arith.constant 0 : index
    %86 = vector.load %arg9[%c0_22, %c0_23, %c0_24] : memref<1x8x128xf32, #tpu.memory_space<vmem>>, vector<1x8x128xf32>
    %87 = vector.shape_cast %86 : vector<1x8x128xf32> to vector<8x128xf32>
    %88 = vector.shape_cast %85 : vector<8x128xf32> to vector<1x8x128xf32>
    tpu.vector_store %arg9[%c0_22, %c0_23, %c0_24], %88 {strides = array<i32>} : memref<1x8x128xf32, #tpu.memory_space<vmem>>, vector<1x8x128xf32>,
    return
  }
  func.func @transform_0(%arg0: i32, %arg1: memref<8xf32, #tpu.memory_space<smem>>, %arg2: memref<8xf32, #tpu.memory_space<smem>>, %arg3: memref<8xf32, #tpu.memory_space<smem>>) -> (i32, i32, i32) {
    %c0_i32 = arith.constant 0 : i32
    %c0_i32_0 = arith.constant 0 : i32
    %c0_i32_1 = arith.constant 0 : i32
    return %arg0, %c0_i32, %c0_i32_0 : i32, i32, i32
  }
  func.func @transform_1(%arg0: i32, %arg1: memref<8xf32, #tpu.memory_space<smem>>, %arg2: memref<8xf32, #tpu.memory_space<smem>>, %arg3: memref<8xf32, #tpu.memory_space<smem>>) -> (i32, i32, i32) {
    %c0_i32 = arith.constant 0 : i32
    %c0_i32_0 = arith.constant 0 : i32
    %c0_i32_1 = arith.constant 0 : i32
    return %arg0, %c0_i32, %c0_i32_0 : i32, i32, i32
  }
  func.func @transform_2(%arg0: i32, %arg1: memref<8xf32, #tpu.memory_space<smem>>, %arg2: memref<8xf32, #tpu.memory_space<smem>>, %arg3: memref<8xf32, #tpu.memory_space<smem>>) -> (i32, i32) {
    %c0_i32 = arith.constant 0 : i32
    %c0_i32_0 = arith.constant 0 : i32
    %c0_i32_1 = arith.constant 0 : i32
    return %c0_i32, %c0_i32_0 : i32, i32
  }
  func.func @transform_3(%arg0: i32, %arg1: memref<8xf32, #tpu.memory_space<smem>>, %arg2: memref<8xf32, #tpu.memory_space<smem>>, %arg3: memref<8xf32, #tpu.memory_space<smem>>) -> (i32, i32) {
    %c0_i32 = arith.constant 0 : i32
    %c0_i32_0 = arith.constant 0 : i32
    %c0_i32_1 = arith.constant 0 : i32
    return %c0_i32, %c0_i32_0 : i32, i32
  }
  func.func @transform_4(%arg0: i32, %arg1: memref<8xf32, #tpu.memory_space<smem>>, %arg2: memref<8xf32, #tpu.memory_space<smem>>, %arg3: memref<8xf32, #tpu.memory_space<smem>>) -> (i32, i32) {
    %c0_i32 = arith.constant 0 : i32
    %c0_i32_0 = arith.constant 0 : i32
    %c0_i32_1 = arith.constant 0 : i32
    return %c0_i32, %c0_i32_0 : i32, i32
  }
  func.func @transform_5(%arg0: i32, %arg1: memref<8xf32, #tpu.memory_space<smem>>, %arg2: memref<8xf32, #tpu.memory_space<smem>>, %arg3: memref<8xf32, #tpu.memory_space<smem>>) -> (i32, i32, i32) {
    %c0_i32 = arith.constant 0 : i32
    %c0_i32_0 = arith.constant 0 : i32
    %c0_i32_1 = arith.constant 0 : i32
    return %arg0, %c0_i32, %c0_i32_0 : i32, i32, i32
  }
}

</mosaic_0001>

<llo_original>
// kernel: tpu_custom_call.1
$region0: #{tpu_custom_call.1}
  #allocation0 [shape = 'u32[]', space=smem, size = 0x4, offset = 0x4, fixed_abs, tag = 'smem constant byte address 0x4 - core index']
  #allocation1 [shape = 'u32[72,128]{1,0:T(1,128)}', space=vmem, size = 0x9000, scoped, tag = 'internal scratch']
  #allocation2 [shape = 's32[1]{0}', space=sflag, size = 0x4, scoped, tag = 'scoped memory for tpu_custom_call.1']
  #allocation3 [shape = 'u8[512]{0}', space=smem, size = 0x200, scoped, tag = 'prefetched SMEM operand 0']
  #allocation4 [shape = 'u8[512]{0}', space=smem, size = 0x200, scoped, tag = 'prefetched SMEM operand 1']
  #allocation5 [shape = 'u8[512]{0}', space=smem, size = 0x200, scoped, tag = 'prefetched SMEM operand 2']
  %s0 = inlined_call_operand.vmem [shape: f32[8], index: 0, kind: input, shape index: {}]
  %s1 = inlined_call_operand.vmem [shape: f32[8], index: 1, kind: input, shape index: {}]
  %s2 = inlined_call_operand.vmem [shape: f32[8], index: 2, kind: input, shape index: {}]
  %s3 = inlined_call_operand.hbm [shape: bf16[8,8,256], index: 3, kind: input, shape index: {}]
  %s4 = inlined_call_operand.hbm [shape: bf16[8,8,256], index: 4, kind: input, shape index: {}]
  %s5 = inlined_call_operand.vmem [shape: f32[8,8], index: 5, kind: input, shape index: {}]
  %s6 = inlined_call_operand.vmem [shape: f32[8,1], index: 6, kind: input, shape index: {}]
  %s7 = inlined_call_operand.vmem [shape: f32[8,1], index: 7, kind: input, shape index: {}]
  %s8 = inlined_call_operand.hbm [shape: f32[4,8,128], index: 8, kind: output, shape index: {}]
  %s9 = sld [smem:[#allocation0]]
  $region61: #{tpu_custom_call.1} parent=0
    _
  %s11 = ssub.s32 1, %s9
  %s12 = scalar_select 0, %s11, %s9
  %s14 = sshll.u32 %s0, 4
  %s15 = int_to_ptr.vmem [resolvable:$true] %s14
  %17 = dma.vmem_to_smem %s15, 16, [#allocation3], [#allocation2]
  %s19 = sshll.u32 %s1, 4
  %s20 = int_to_ptr.vmem [resolvable:$true] %s19
  %22 = dma.vmem_to_smem %s20, 16, [#allocation4], [#allocation2]
  %s24 = sshll.u32 %s2, 4
  %s25 = int_to_ptr.vmem [resolvable:$true] %s24
  %27 = dma.vmem_to_smem %s25, 16, [#allocation5], [#allocation2]
  %29 = dma.done [#allocation2], 48
  %30 = sfence
  $region1: #{tpu_custom_call.1} parent=0
    #allocation6 [shape = 'u8[16384]{0}', space=vmem, size = 0x4000, scoped, tag = 'input window, operand 3']
    #allocation7 [shape = 's32[2]{0}', space=sflag, size = 0x8, scoped, tag = 'scoped memory for tpu_custom_call.1']
    #allocation8 [shape = 's32[2]{0}', space=sflag, size = 0x8, scoped, tag = 'scoped memory for tpu_custom_call.1']
    #allocation9 [shape = 'u8[16384]{0}', space=vmem, size = 0x4000, scoped, tag = 'input window, operand 4']
    #allocation10 [shape = 's32[2]{0}', space=sflag, size = 0x8, scoped, tag = 'scoped memory for tpu_custom_call.1']
    #allocation11 [shape = 'u8[8192]{0}', space=vmem, size = 0x2000, scoped, tag = 'output window, operand 0']
    %31 = vsyncpa [#allocation7], 0
    %s32 = scalar_lea.sflag [#allocation7], 1
    %33 = vsyncpa %s32, 0
    %34 = vsyncpa [#allocation10], 0
    %s35 = scalar_lea.sflag [#allocation10], 1
    %36 = vsyncpa %s35, 0
    %37 = vsyncpa [#allocation8], 0
    %s38 = scalar_lea.sflag [#allocation8], 1
    %39 = vsyncpa %s38, 0
    loop: start=0, step=1, limit=6
    $region2: #{tpu_custom_call.1} parent=1 // loop_pre_header
      _
    $region3: #{tpu_custom_call.1} parent=1 // loop_header
      %s41 = sphi 0, %s45
      %p42 = scmp.ge.s32.totalorder %s41, 6
      %s51 = sphi 0, %s53
      %s54 = sphi 0, %s51
      %s55 = sphi 0, %s54
      %s71 = sphi 0, %s55
      %s77 = sphi 0, %s79
      %s80 = sphi 0, %s77
      %s81 = sphi 0, %s80
      %s97 = sphi 0, %s81
      %s101 = sphi 0, %s101
      %s103 = sphi 0, %s101
      %s104 = sphi 0, %s103
      %s118 = sphi 0, %s104
      %s122 = sphi 0, %s122
      %s124 = sphi 0, %s122
      %s125 = sphi 0, %s124
      %s139 = sphi 0, %s125
      %s143 = sphi 0, %s143
      %s145 = sphi 0, %s143
      %s146 = sphi 0, %s145
      %s160 = sphi 0, %s146
      %s166 = sphi 0, %s168
      %s169 = sphi 0, %s166
      %s170 = sphi 0, %s169
      %s186 = sphi 0, %s170
    $region4: #{tpu_custom_call.1} parent=1 // loop_header_branch
      %44 = sbr.rel (%p42) target = $region8
    $region5: #{tpu_custom_call.1} parent=1 // loop_body
      %s46 = ssub.s32 %s41, 1
      %s47 = ssub.s32 %s41, 2
      %s48 = sadd.s32 %s41, 1
      %s49 = ssub.s32 %s41, %s48
      %p50 = scmp.eq.s32.totalorder %s49, 0
      %s52 = sadd.s32 %s51, 1
      %s53 = scalar_select %p50, %s51, %s52
      %p56 = pneg %p50
      %p57 = scmp.eq.s32.totalorder %s41, 3
      %p58 = por %p56, %p57
      %p59 = scmp.ne.s32.totalorder %s51, %s54
      %p60 = scmp.eq.s32.totalorder %s41, 0
      %p61 = por %p59, %p60
      %p62 = scmp.ne.s32.totalorder %s51, %s54
      %p63 = scmp.eq.s32.totalorder %s46, 3
      %p64 = por %p62, %p63
      %p65 = scmp.ne.s32.totalorder %s54, %s55
      %p66 = scmp.eq.s32.totalorder %s46, 0
      %p67 = por %p65, %p66
      %p68 = scmp.ne.s32.totalorder %s54, %s55
      %p69 = scmp.eq.s32.totalorder %s47, 3
      %p70 = por %p68, %p69
      %p72 = scmp.ne.s32.totalorder %s55, %s71
      %p73 = scmp.eq.s32.totalorder %s47, 0
      %p74 = por %p72, %p73
      %s75 = ssub.s32 %s41, %s48
      %p76 = scmp.eq.s32.totalorder %s75, 0
      %s78 = sadd.s32 %s77, 1
      %s79 = scalar_select %p76, %s77, %s78
      %p82 = pneg %p76
      %p83 = scmp.eq.s32.totalorder %s41, 3
      %p84 = por %p82, %p83
      %p85 = scmp.ne.s32.totalorder %s77, %s80
      %p86 = scmp.eq.s32.totalorder %s41, 0
      %p87 = por %p85, %p86
      %p88 = scmp.ne.s32.totalorder %s77, %s80
      %p89 = scmp.eq.s32.totalorder %s46, 3
      %p90 = por %p88, %p89
      %p91 = scmp.ne.s32.totalorder %s80, %s81
      %p92 = scmp.eq.s32.totalorder %s46, 0
      %p93 = por %p91, %p92
      %p94 = scmp.ne.s32.totalorder %s80, %s81
      %p95 = scmp.eq.s32.totalorder %s47, 3
      %p96 = por %p94, %p95
      %p98 = scmp.ne.s32.totalorder %s81, %s97
      %p99 = scmp.eq.s32.totalorder %s47, 0
      %p100 = por %p98, %p99
      %s102 = sadd.s32 %s101, 1
      %p105 = scmp.eq.s32.totalorder %s41, 3
      %p106 = scmp.ne.s32.totalorder %s101, %s103
      %p107 = scmp.eq.s32.totalorder %s41, 0
      %p108 = por %p106, %p107
      %p109 = scmp.ne.s32.totalorder %s101, %s103
      %p110 = scmp.eq.s32.totalorder %s46, 3
      %p111 = por %p109, %p110
      %p112 = scmp.ne.s32.totalorder %s103, %s104
      %p113 = scmp.eq.s32.totalorder %s46, 0
      %p114 = por %p112, %p113
      %p115 = scmp.ne.s32.totalorder %s103, %s104
      %p116 = scmp.eq.s32.totalorder %s47, 3
      %p117 = por %p115, %p116
      %p119 = scmp.ne.s32.totalorder %s104, %s118
      %p120 = scmp.eq.s32.totalorder %s47, 0
      %p121 = por %p119, %p120
      %s123 = sadd.s32 %s122, 1
      %p126 = scmp.eq.s32.totalorder %s41, 3
      %p127 = scmp.ne.s32.totalorder %s122, %s124
      %p128 = scmp.eq.s32.totalorder %s41, 0
      %p129 = por %p127, %p128
      %p130 = scmp.ne.s32.totalorder %s122, %s124
      %p131 = scmp.eq.s32.totalorder %s46, 3
      %p132 = por %p130, %p131
      %p133 = scmp.ne.s32.totalorder %s124, %s125
      %p134 = scmp.eq.s32.totalorder %s46, 0
      %p135 = por %p133, %p134
      %p136 = scmp.ne.s32.totalorder %s124, %s125
      %p137 = scmp.eq.s32.totalorder %s47, 3
      %p138 = por %p136, %p137
      %p140 = scmp.ne.s32.totalorder %s125, %s139
      %p141 = scmp.eq.s32.totalorder %s47, 0
      %p142 = por %p140, %p141
      %s144 = sadd.s32 %s143, 1
      %p147 = scmp.eq.s32.totalorder %s41, 3
      %p148 = scmp.ne.s32.totalorder %s143, %s145
      %p149 = scmp.eq.s32.totalorder %s41, 0
      %p150 = por %p148, %p149
      %p151 = scmp.ne.s32.totalorder %s143, %s145
      %p152 = scmp.eq.s32.totalorder %s46, 3
      %p153 = por %p151, %p152
      %p154 = scmp.ne.s32.totalorder %s145, %s146
      %p155 = scmp.eq.s32.totalorder %s46, 0
      %p156 = por %p154, %p155
      %p157 = scmp.ne.s32.totalorder %s145, %s146
      %p158 = scmp.eq.s32.totalorder %s47, 3
      %p159 = por %p157, %p158
      %p161 = scmp.ne.s32.totalorder %s146, %s160
      %p162 = scmp.eq.s32.totalorder %s47, 0
      %p163 = por %p161, %p162
      %s164 = ssub.s32 %s41, %s48
      %p165 = scmp.eq.s32.totalorder %s164, 0
      %s167 = sadd.s32 %s166, 1
      %s168 = scalar_select %p165, %s166, %s167
      %p171 = pneg %p165
      %p172 = scmp.eq.s32.totalorder %s41, 3
      %p173 = por %p171, %p172
      %p174 = scmp.ne.s32.totalorder %s166, %s169
      %p175 = scmp.eq.s32.totalorder %s41, 0
      %p176 = por %p174, %p175
      %p177 = scmp.ne.s32.totalorder %s166, %s169
      %p178 = scmp.eq.s32.totalorder %s46, 3
      %p179 = por %p177, %p178
      %p180 = scmp.ne.s32.totalorder %s169, %s170
      %p181 = scmp.eq.s32.totalorder %s46, 0
      %p182 = por %p180, %p181
      %p183 = scmp.ne.s32.totalorder %s169, %s170
      %p184 = scmp.eq.s32.totalorder %s47, 3
      %p185 = por %p183, %p184
      %p187 = scmp.ne.s32.totalorder %s170, %s186
      %p188 = scmp.eq.s32.totalorder %s47, 0
      %p189 = por %p187, %p188
      %p190 = scmp.le.s32.totalorder 1, %s41
      %p191 = scmp.lt.s32.totalorder %s41, 5
      %p192 = pnand %p190, %p191
      %p193 = pneg %p192
      // Predicated region
      $region9: #{tpu_custom_call.1} parent=5 // pred_check
        _
      $region10: #{tpu_custom_call.1} parent=5 // pred_check_branch
        %195 = sbr.rel (%p192) target = $region12
      $region11: #{tpu_custom_call.1} parent=5 // pred_region
        %s196 = ssub.s32 %s41, 1
        // Predicated region
        $region13: #{tpu_custom_call.1} parent=11 // pred_check
          %p197 = pneg %p114
        $region14: #{tpu_custom_call.1} parent=11 // pred_check_branch
          %199 = sbr.rel (%p197) target = $region16
        $region15: #{tpu_custom_call.1} parent=11 // pred_region
          _
        $region16: #{tpu_custom_call.1} parent=11 // pred_fallthru
          _
        // Predicated region
        $region17: #{tpu_custom_call.1} parent=11 // pred_check
          %p200 = pneg %p135
        $region18: #{tpu_custom_call.1} parent=11 // pred_check_branch
          %202 = sbr.rel (%p200) target = $region20
        $region19: #{tpu_custom_call.1} parent=11 // pred_region
          _
        $region20: #{tpu_custom_call.1} parent=11 // pred_fallthru
          _
        // Predicated region
        $region21: #{tpu_custom_call.1} parent=11 // pred_check
          %p203 = pneg %p156
        $region22: #{tpu_custom_call.1} parent=11 // pred_check_branch
          %205 = sbr.rel (%p203) target = $region24
        $region23: #{tpu_custom_call.1} parent=11 // pred_region
          _
        $region24: #{tpu_custom_call.1} parent=11 // pred_fallthru
          _
      $region12: #{tpu_custom_call.1} parent=5 // pred_fallthru
        _
      %p206 = scmp.lt.s32.totalorder %s41, 4
      // Predicated region
      $region25: #{tpu_custom_call.1} parent=5 // pred_check
        %p207 = pneg %p206
      $region26: #{tpu_custom_call.1} parent=5 // pred_check_branch
        %209 = sbr.rel (%p207) target = $region28
      $region27: #{tpu_custom_call.1} parent=5 // pred_region
        // Predicated region
        $region29: #{tpu_custom_call.1} parent=27 // pred_check
          %p210 = pneg %p61
        $region30: #{tpu_custom_call.1} parent=27 // pred_check_branch
          %212 = sbr.rel (%p210) target = $region32
        $region31: #{tpu_custom_call.1} parent=27 // pred_region
          %s213 = sand.u32 %s51, 1
          %s214 = scalar_lea.sflag [#allocation7], %s213
          %s215 = sand.u32 %s51, 1
          %s216 = smul.addr %s215, 16
          %s217 = scalar_lea.vmem [#allocation6], %s216
          %s218 = smul.u32 2, %s41
          %220 = vsyncadd %s214, 0
          %s221 = smul.addr %s218, 2
          %s222 = smul.addr %s221, 4
          %s223 = scalar_lea.hbm %s3, %s222
          %s224 = sshll.u32 %s223, 4
          %s225 = int_to_ptr.hbm [resolvable:$true] %s224
          %s226 = sshll.u32 %s217, 4
          %s227 = int_to_ptr.vmem [resolvable:$true] %s226
          %232 = dma.hbm_to_vmem [thread:$0]  %s225, 256, %s227, %s214, 128, 128, 8
        $region32: #{tpu_custom_call.1} parent=27 // pred_fallthru
          _
        // Predicated region
        $region33: #{tpu_custom_call.1} parent=27 // pred_check
          %p233 = pneg %p87
        $region34: #{tpu_custom_call.1} parent=27 // pred_check_branch
          %235 = sbr.rel (%p233) target = $region36
        $region35: #{tpu_custom_call.1} parent=27 // pred_region
          %s236 = sand.u32 %s77, 1
          %s237 = scalar_lea.sflag [#allocation10], %s236
          %s238 = sand.u32 %s77, 1
          %s239 = smul.addr %s238, 16
          %s240 = scalar_lea.vmem [#allocation9], %s239
          %s241 = smul.u32 2, %s41
          %243 = vsyncadd %s237, 0
          %s244 = smul.addr %s241, 2
          %s245 = smul.addr %s244, 4
          %s246 = scalar_lea.hbm %s4, %s245
          %s247 = sshll.u32 %s246, 4
          %s248 = int_to_ptr.hbm [resolvable:$true] %s247
          %s249 = sshll.u32 %s240, 4
          %s250 = int_to_ptr.vmem [resolvable:$true] %s249
          %255 = dma.hbm_to_vmem [thread:$0]  %s248, 256, %s250, %s237, 128, 128, 8
        $region36: #{tpu_custom_call.1} parent=27 // pred_fallthru
          _
      $region28: #{tpu_custom_call.1} parent=5 // pred_fallthru
        _
      %p256 = scmp.le.s32.totalorder 1, %s41
      %p257 = scmp.lt.s32.totalorder %s41, 5
      %p258 = pnand %p256, %p257
      %p259 = pneg %p258
      // Predicated region
      $region37: #{tpu_custom_call.1} parent=5 // pred_check
        _
      $region38: #{tpu_custom_call.1} parent=5 // pred_check_branch
        %261 = sbr.rel (%p258) target = $region40
      $region39: #{tpu_custom_call.1} parent=5 // pred_region
        %s262 = ssub.s32 %s41, 1
        %s263 = sand.u32 %s54, 1
        %s264 = scalar_lea.sflag [#allocation7], %s263
        %s265 = sand.u32 %s54, 1
        %s266 = smul.addr %s265, 16
        %s267 = scalar_lea.vmem [#allocation6], %s266
        // Predicated region
        $region41: #{tpu_custom_call.1} parent=39 // pred_check
          %p268 = pneg %p67
        $region42: #{tpu_custom_call.1} parent=39 // pred_check_branch
          %270 = sbr.rel (%p268) target = $region44
        $region43: #{tpu_custom_call.1} parent=39 // pred_region
          %272 = dma.done %s264, 256
        $region44: #{tpu_custom_call.1} parent=39 // pred_fallthru
          _
        %s273 = sand.u32 %s80, 1
        %s274 = scalar_lea.sflag [#allocation10], %s273
        %s275 = sand.u32 %s80, 1
        %s276 = smul.addr %s275, 16
        %s277 = scalar_lea.vmem [#allocation9], %s276
        // Predicated region
        $region45: #{tpu_custom_call.1} parent=39 // pred_check
          %p278 = pneg %p93
        $region46: #{tpu_custom_call.1} parent=39 // pred_check_branch
          %280 = sbr.rel (%p278) target = $region48
        $region47: #{tpu_custom_call.1} parent=39 // pred_region
          %282 = dma.done %s274, 256
        $region48: #{tpu_custom_call.1} parent=39 // pred_fallthru
          _
        %s283 = sand.u32 %s54, 1
        %s284 = scalar_lea.sflag [#allocation7], %s283
        %s285 = sand.u32 %s54, 1
        %s286 = smul.addr %s285, 16
        %s287 = scalar_lea.vmem [#allocation6], %s286
        %p288 = pneg %p67
        %p289 = pneg %p64
        %s290 = sand.u32 %s80, 1
        %s291 = scalar_lea.sflag [#allocation10], %s290
        %s292 = sand.u32 %s80, 1
        %s293 = smul.addr %s292, 16
        %s294 = scalar_lea.vmem [#allocation9], %s293
        %p295 = pneg %p93
        %p296 = pneg %p90
        %p297 = pneg %p114
        %p298 = pneg %p111
        %p299 = pneg %p135
        %p300 = pneg %p132
        %p301 = pneg %p156
        %p302 = pneg %p153
        %p303 = pneg %p182
        %p304 = pneg %p179
        %s305 = sand.u32 %s169, 1
        %s306 = scalar_lea.sflag [#allocation8], %s305
        %s307 = sand.u32 %s169, 1
        %s308 = smul.addr %s307, 8
        %s309 = scalar_lea.vmem [#allocation11], %s308
        %s310 = smul.u32 2, %s46
        %s311 = smul.u32 2, %s46
        %s312 = smul.u32 %s46, 2
        %s313 = sld [smem:[#allocation3 + %s312]]
        %s314 = sld [smem:[#allocation4 + %s312]]
        %s315 = sld [smem:[#allocation5 + %s312]]
        %v316 = vld [vmem:[%s267] sm:$0xff]
        %v317 = vunpack.c.l.bf16 %v316
        %v318 = vunpack.c.h.bf16 %v316
        %v319 = vld [vmem:[%s277] sm:$0xff]
        %v320 = vunpack.c.l.bf16 %v319
        %v321 = vunpack.c.h.bf16 %v319
        %v322 = vstv %s313
        %v323 = vmul.f32 %v317, %v322
        %v324 = vmul.f32 %v318, %v322
        %v325 = vstv %s314
        %v326 = vmul.f32 %v320, %v325
        %v327 = vmul.f32 %v321, %v325
        %v328 = vadd.f32 %v323, %v326
        %v329 = vadd.f32 %v324, %v327
        %v330 = vmul.f32 %v320, %v322
        %v331 = vmul.f32 %v321, %v322
        %v332 = vmul.f32 %v317, %v325
        %v333 = vmul.f32 %v318, %v325
        %v334 = vsub.f32 %v330, %v332
        %v335 = vsub.f32 %v331, %v333
        %v336 = vld [vmem:[%s5] sm:$0xff]
        %vm337 = vcmask 64512
        %v339 = vsel %vm337, %v336, 0
        %341 = vmatpush.msra.mxu0 0.0
        %342 = vmatpush.msra.mxu0 0.0
        %343 = vmatpush.msra.mxu0 0.0
        %344 = vmatpush.msra.mxu0 0.0
        %345 = vmatpush.msra.mxu0 0.0
        %346 = vmatpush.msra.mxu0 0.0
        %347 = vmatpush.msra.mxu0 0.0
        %348 = vmatpush.msra.mxu0 0.0
        %349 = vmatpush.msra.mxu0 0.0
        %350 = vmatpush.msra.mxu0 0.0
        %351 = vmatpush.msra.mxu0 0.0
        %352 = vmatpush.msra.mxu0 0.0
        %353 = vmatpush.msra.mxu0 0.0
        %354 = vmatpush.msra.mxu0 0.0
        %355 = vmatpush.msra.mxu0 0.0
        %356 = vmatpush.msra.mxu0 %v328
        %357 = vmatmul.f32.gmra.mxu0 %v339
        %v358 = vpop.f32.mrf.mxu0
        %v359 = vadd.f32 0.0, %v358
        %360 = vdwg.mxu0
        %361 = vmatpush.msra.mxu0 0.0
        %362 = vmatpush.msra.mxu0 0.0
        %363 = vmatpush.msra.mxu0 0.0
        %364 = vmatpush.msra.mxu0 0.0
        %365 = vmatpush.msra.mxu0 0.0
        %366 = vmatpush.msra.mxu0 0.0
        %367 = vmatpush.msra.mxu0 0.0
        %368 = vmatpush.msra.mxu0 0.0
        %369 = vmatpush.msra.mxu0 0.0
        %370 = vmatpush.msra.mxu0 0.0
        %371 = vmatpush.msra.mxu0 0.0
        %372 = vmatpush.msra.mxu0 0.0
        %373 = vmatpush.msra.mxu0 0.0
        %374 = vmatpush.msra.mxu0 0.0
        %375 = vmatpush.msra.mxu0 0.0
        %376 = vmatpush.msra.mxu0 %v329
        %377 = vmatmul.f32.gmra.mxu0 %v339
        %v378 = vpop.f32.mrf.mxu0
        %v379 = vadd.f32 0.0, %v378
        %380 = vdwg.mxu0
        %v381 = vld [vmem:[%s6] sm:$0xff]
        %v382 = vld [vmem:[%s7] sm:$0xff]
        %v383 = vstv %s315
        %v384 = vmul.f32 %v382, %v383
        %v385 = vadd.f32 %v381, %v384
        %v386 = vsub.f32 %v359, %v334
        %v387 = vsub.f32 %v379, %v335
        %389 = vset.pattern.permute.xlu0 0
        %390 = vperm.xlu0 %389, %v385
        %v391 = vpop.permute.xlu0 %390
        %v393 = vadd.f32 %v386, %v391
        %v394 = vadd.f32 %v387, %v391
        %v395 = vmul.f32 %v393, %v393
        %v396 = vmul.f32 %v394, %v394
        %v397 = vadd.f32 %v395, 0.0
        %v398 = vadd.f32 %v397, %v396
        %s399 = sadd.s32 %s312, 1
        %s400 = sld [smem:[#allocation3 + %s399]]
        %s401 = sld [smem:[#allocation4 + %s399]]
        %s402 = sld [smem:[#allocation5 + %s399]]
        %s403 = scalar_lea.vmem %s267, 8 [#allocation6]
        %v404 = vld [vmem:[%s403] sm:$0xff]
        %v405 = vunpack.c.l.bf16 %v404
        %v406 = vunpack.c.h.bf16 %v404
        %s407 = scalar_lea.vmem %s277, 8 [#allocation9]
        %v408 = vld [vmem:[%s407] sm:$0xff]
        %v409 = vunpack.c.l.bf16 %v408
        %v410 = vunpack.c.h.bf16 %v408
        %v411 = vstv %s400
        %v412 = vmul.f32 %v405, %v411
        %v413 = vmul.f32 %v406, %v411
        %v414 = vstv %s401
        %v415 = vmul.f32 %v409, %v414
        %v416 = vmul.f32 %v410, %v414
        %v417 = vadd.f32 %v412, %v415
        %v418 = vadd.f32 %v413, %v416
        %v419 = vmul.f32 %v409, %v411
        %v420 = vmul.f32 %v410, %v411
        %v421 = vmul.f32 %v405, %v414
        %v422 = vmul.f32 %v406, %v414
        %v423 = vsub.f32 %v419, %v421
        %v424 = vsub.f32 %v420, %v422
        %425 = vmatpush.msra.mxu0 0.0
        %426 = vmatpush.msra.mxu0 0.0
        %427 = vmatpush.msra.mxu0 0.0
        %428 = vmatpush.msra.mxu0 0.0
        %429 = vmatpush.msra.mxu0 0.0
        %430 = vmatpush.msra.mxu0 0.0
        %431 = vmatpush.msra.mxu0 0.0
        %432 = vmatpush.msra.mxu0 0.0
        %433 = vmatpush.msra.mxu0 0.0
        %434 = vmatpush.msra.mxu0 0.0
        %435 = vmatpush.msra.mxu0 0.0
        %436 = vmatpush.msra.mxu0 0.0
        %437 = vmatpush.msra.mxu0 0.0
        %438 = vmatpush.msra.mxu0 0.0
        %439 = vmatpush.msra.mxu0 0.0
        %440 = vmatpush.msra.mxu0 %v417
        %441 = vmatmul.f32.gmra.mxu0 %v339
        %v442 = vpop.f32.mrf.mxu0
        %v443 = vadd.f32 0.0, %v442
        %444 = vdwg.mxu0
        %445 = vmatpush.msra.mxu0 0.0
        %446 = vmatpush.msra.mxu0 0.0
        %447 = vmatpush.msra.mxu0 0.0
        %448 = vmatpush.msra.mxu0 0.0
        %449 = vmatpush.msra.mxu0 0.0
        %450 = vmatpush.msra.mxu0 0.0
        %451 = vmatpush.msra.mxu0 0.0
        %452 = vmatpush.msra.mxu0 0.0
        %453 = vmatpush.msra.mxu0 0.0
        %454 = vmatpush.msra.mxu0 0.0
        %455 = vmatpush.msra.mxu0 0.0
        %456 = vmatpush.msra.mxu0 0.0
        %457 = vmatpush.msra.mxu0 0.0
        %458 = vmatpush.msra.mxu0 0.0
        %459 = vmatpush.msra.mxu0 0.0
        %460 = vmatpush.msra.mxu0 %v418
        %461 = vmatmul.f32.gmra.mxu0 %v339
        %v462 = vpop.f32.mrf.mxu0
        %v463 = vadd.f32 0.0, %v462
        %464 = vdwg.mxu0
        %v465 = vstv %s402
        %v466 = vmul.f32 %v382, %v465
        %v467 = vadd.f32 %v381, %v466
        %v468 = vsub.f32 %v443, %v423
        %v469 = vsub.f32 %v463, %v424
        %471 = vset.pattern.permute.xlu0 0
        %472 = vperm.xlu0 %471, %v467
        %v473 = vpop.permute.xlu0 %472
        %v475 = vadd.f32 %v468, %v473
        %v476 = vadd.f32 %v469, %v473
        %v477 = vmul.f32 %v475, %v475
        %v478 = vmul.f32 %v476, %v476
        %v479 = vadd.f32 %v398, %v477
        %v480 = vadd.f32 %v479, %v478
        %481 = vst [vmem:[%s309] sm:$0xff] %v480
        %s482 = sand.u32 %s169, 1
        %s483 = scalar_lea.sflag [#allocation8], %s482
        %s484 = sand.u32 %s169, 1
        %s485 = smul.addr %s484, 8
        %s486 = scalar_lea.vmem [#allocation11], %s485
        // Predicated region
        $region49: #{tpu_custom_call.1} parent=39 // pred_check
          %p487 = pneg %p179
        $region50: #{tpu_custom_call.1} parent=39 // pred_check_branch
          %489 = sbr.rel (%p487) target = $region52
        $region51: #{tpu_custom_call.1} parent=39 // pred_region
          %491 = vsyncadd %s483, 0
          %s492 = smul.addr %s46, 8
          %s493 = scalar_lea.hbm %s8, %s492
          %s495 = sshll.u32 %s486, 4
          %s496 = int_to_ptr.vmem [resolvable:$true] %s495
          %s497 = sshll.u32 %s493, 4
          %s498 = int_to_ptr.hbm [resolvable:$true] %s497
          %500 = dma.vmem_to_hbm [thread:$0]  %s496, 128, %s498, %s483
        $region52: #{tpu_custom_call.1} parent=39 // pred_fallthru
          _
      $region40: #{tpu_custom_call.1} parent=5 // pred_fallthru
        _
      %p501 = scmp.le.s32.totalorder 2, %s41
      // Predicated region
      $region53: #{tpu_custom_call.1} parent=5 // pred_check
        %p502 = pneg %p501
      $region54: #{tpu_custom_call.1} parent=5 // pred_check_branch
        %504 = sbr.rel (%p502) target = $region56
      $region55: #{tpu_custom_call.1} parent=5 // pred_region
        %s505 = ssub.s32 %s41, 2
        // Predicated region
        $region57: #{tpu_custom_call.1} parent=55 // pred_check
          %p506 = pneg %p185
        $region58: #{tpu_custom_call.1} parent=55 // pred_check_branch
          %508 = sbr.rel (%p506) target = $region60
        $region59: #{tpu_custom_call.1} parent=55 // pred_region
          %s509 = sand.u32 %s170, 1
          %s510 = scalar_lea.sflag [#allocation8], %s509
          %s511 = sand.u32 %s170, 1
          %s512 = smul.addr %s511, 8
          %s513 = scalar_lea.vmem [#allocation11], %s512
          %515 = dma.done %s510, 128
        $region60: #{tpu_custom_call.1} parent=55 // pred_fallthru
          _
      $region56: #{tpu_custom_call.1} parent=5 // pred_fallthru
        _
    $region6: #{tpu_custom_call.1} parent=1 // loop_footer
      %s45 = sadd.s32 1, %s41
    $region7: #{tpu_custom_call.1} parent=1 // loop_footer_branch
      %40 = sbr.rel target = $region3
    $region8: #{tpu_custom_call.1} parent=1 // loop_exit
      _
    %516 = vsyncpa [#allocation7], 1
    %s517 = scalar_lea.sflag [#allocation7], 1
    %518 = vsyncpa %s517, 1
    %519 = vsyncpa [#allocation10], 1
    %s520 = scalar_lea.sflag [#allocation10], 1
    %521 = vsyncpa %s520, 1
    %522 = vsyncpa [#allocation8], 1
    %s523 = scalar_lea.sflag [#allocation8], 1
    %524 = vsyncpa %s523, 1

</llo_original>
